<compile_context>
chip_gen: v6e
topology: v6e:2x2x1
jax: 0.10.0
libtpu: 0.0.40
codegen_flags: <defaults>
</compile_context>

<pallas_src>
import functools

import jax
import jax.numpy as jnp
from jax.experimental import pallas as pl
from jax.experimental.pallas import tpu as pltpu

LANE = 128  # TPU lane width


def _round_up(x, m):
    return (x + m - 1) // m * m


def _mlp_fused_kernel(x_ref, *refs, num_layers):
    """Fused Linear(+ReLU) stack for one batch tile.

    refs = (w_0, b_0, w_1, b_1, ..., w_{L-1}, b_{L-1}, o_ref)
    x_ref : (tile_m, din)          -- bf16/f32
    w_l   : (fan_in_l, fan_out_l)  -- padded to lane-multiples (except din)
    b_l   : (1, fan_out_l)
    o_ref : (tile_m, dout_padded)
    """
    o_ref = refs[-1]
    wb = refs[:-1]
    h = x_ref[...]
    for l in range(num_layers):
        w = wb[2 * l][...]
        b = wb[2 * l + 1][...]
        # f32 accumulation on the MXU; intermediates stay f32 (never hit HBM).
        h = jnp.dot(h, w, preferred_element_type=jnp.float32) + b
        if l != num_layers - 1:
            h = jnp.maximum(h, 0.0)
    o_ref[...] = h.astype(o_ref.dtype)


def _pad_params(params):
    """Zero-pad fan_out (and fan_in of layers > 0) up to multiples of 128."""
    padded = []
    for l, (w, b) in enumerate(params):
        fi, fo = w.shape
        fi_p = fi if l == 0 else _round_up(fi, LANE)   # layer-0 keeps raw dim_in
        fo_p = _round_up(fo, LANE)
        w_p = jnp.zeros((fi_p, fo_p), w.dtype).at[:fi, :fo].set(w)
        b_p = jnp.zeros((1, fo_p), b.dtype).at[:, :fo].set(b)
        padded.append((w_p, b_p))
    return padded


def _choose_tile_m(n):
    # Big tiles amortize per-step overhead; keep >= 2 grid steps when the
    # batch allows it so both v7x TensorCores receive work.
    if n <= 256:
        return 128
    return 512


def mlp_forward(x, params, *, tile_m=None):
    """y = MLP(x) with all layers fused into one pallas_call.

    x      : (N, dim_in)
    params : list of (w, b); w is (fan_in, fan_out) (transpose of nn.Linear
             weight), b is (1, fan_out).
    """
    n, dim_in = x.shape
    num_layers = len(params)
    dim_out = params[-1][0].shape[1]

    padded_params = _pad_params(params)
    dout_p = padded_params[-1][0].shape[1]

    if tile_m is None:
        tile_m = _choose_tile_m(n)
    n_p = _round_up(n, tile_m)
    if n_p != n:
        x = jnp.pad(x, ((0, n_p - n), (0, 0)))  # zero rows; sliced off below

    grid = (n_p // tile_m,)

    in_specs = [pl.BlockSpec((tile_m, dim_in), lambda i: (i, 0))]
    flat_wb = []
    for (w_p, b_p) in padded_params:
        # Full weight/bias resident in VMEM for every batch tile.
        in_specs.append(pl.BlockSpec(w_p.shape, lambda i: (0, 0)))
        in_specs.append(pl.BlockSpec(b_p.shape, lambda i: (0, 0)))
        flat_wb += [w_p, b_p]

    kernel = functools.partial(_mlp_fused_kernel, num_layers=num_layers)
    out = pl.pallas_call(
        kernel,
        out_shape=jax.ShapeDtypeStruct((n_p, dout_p), x.dtype),
        grid=grid,
        in_specs=in_specs,
        out_specs=pl.BlockSpec((tile_m, dout_p), lambda i: (i, 0)),
        compiler_params=pltpu.CompilerParams(
            dimension_semantics=("parallel",),
        ),
    )(x, *flat_wb)

    return out[:n, :dim_out]


def init_mlp_params(key, dim_in, dim_out, dim_hidden, num_layers,
                    dtype=jnp.bfloat16):
    """Deterministic init matching nn.Linear (weights stored transposed)."""
    params = []
    for l in range(num_layers):
        fan_in = dim_in if l == 0 else dim_hidden
        fan_out = dim_out if l == num_layers - 1 else dim_hidden
        key, kw, kb = jax.random.split(key, 3)
        bound = 1.0 / float(fan_in) ** 0.5
        w = jax.random.uniform(kw, (fan_in, fan_out), jnp.float32, -bound, bound)
        b = jax.random.uniform(kb, (1, fan_out), jnp.float32, -bound, bound)
        params.append((w.astype(dtype), b.astype(dtype)))
    return params


if __name__ == "__main__":
    # Shapes consistent with the module: MLP(dim_in=32, dim_out=16,
    # dim_hidden=64, num_layers=3) applied to N=256 points.
    dim_in, dim_out, dim_hidden, num_layers = 32, 16, 64, 3
    n = 256

    key = jax.random.PRNGKey(0)
    key, kx = jax.random.split(key)
    x = jax.random.normal(kx, (n, dim_in), jnp.float32).astype(jnp.bfloat16)
    params = init_mlp_params(key, dim_in, dim_out, dim_hidden, num_layers,
                             dtype=jnp.bfloat16)

    y = mlp_forward(x, params)
    jax.block_until_ready(y)

    # Pure-JAX f32 reference on the exact same (bf16-quantized) values.
    ref = x.astype(jnp.float32)
    for l, (w, b) in enumerate(params):
        ref = ref @ w.astype(jnp.float32) + b.astype(jnp.float32)
        if l != num_layers - 1:
            ref = jnp.maximum(ref, 0.0)

    assert y.shape == (n, dim_out)
    # Kernel accumulates in f32; only the final cast to bf16 + MXU accumulation
    # order differ from the reference.
    assert jnp.allclose(y.astype(jnp.float32), ref, atol=2e-2, rtol=2e-2)

    print("KERNEL_OK")
</pallas_src>

<mosaic_0001>
module attributes {stable_mosaic.version = 11 : i64} {
  func.func @_mlp_fused_kernel(%arg0: i32, %arg1: memref<128x32xbf16, #tpu.memory_space<vmem>>, %arg2: memref<32x128xbf16, #tpu.memory_space<vmem>>, %arg3: memref<1x128xbf16, #tpu.memory_space<vmem>>, %arg4: memref<128x128xbf16, #tpu.memory_space<vmem>>, %arg5: memref<1x128xbf16, #tpu.memory_space<vmem>>, %arg6: memref<128x128xbf16, #tpu.memory_space<vmem>>, %arg7: memref<1x128xbf16, #tpu.memory_space<vmem>>, %arg8: memref<128x128xbf16, #tpu.memory_space<vmem>>) attributes {dimension_semantics = [#tpu.dimension_semantics<parallel>], iteration_bounds = array<i64: 2>, scalar_prefetch = 0 : i64, scratch_operands = 0 : i64, tpu.core_type = #tpu.core_type<tc>, window_params = [{transform_indices = @transform_0, window_bounds = array<i64: 128, 32>}, {pipeline_mode = #tpu.pipeline_mode<synchronous>, transform_indices = @transform_1, window_bounds = array<i64: 32, 128>}, {pipeline_mode = #tpu.pipeline_mode<synchronous>, transform_indices = @transform_2, window_bounds = array<i64: 1, 128>}, {pipeline_mode = #tpu.pipeline_mode<synchronous>, transform_indices = @transform_3, window_bounds = array<i64: 128, 128>}, {pipeline_mode = #tpu.pipeline_mode<synchronous>, transform_indices = @transform_4, window_bounds = array<i64: 1, 128>}, {pipeline_mode = #tpu.pipeline_mode<synchronous>, transform_indices = @transform_5, window_bounds = array<i64: 128, 128>}, {pipeline_mode = #tpu.pipeline_mode<synchronous>, transform_indices = @transform_6, window_bounds = array<i64: 1, 128>}, {transform_indices = @transform_7, window_bounds = array<i64: 128, 128>}]} {
    %c0 = arith.constant 0 : index
    %c0_0 = arith.constant 0 : index
    %0 = vector.load %arg1[%c0, %c0_0] : memref<128x32xbf16, #tpu.memory_space<vmem>>, vector<128x32xbf16>
    %c0_1 = arith.constant 0 : index
    %c0_2 = arith.constant 0 : index
    %1 = vector.load %arg2[%c0_1, %c0_2] : memref<32x128xbf16, #tpu.memory_space<vmem>>, vector<32x128xbf16>
    %c0_3 = arith.constant 0 : index
    %c0_4 = arith.constant 0 : index
    %2 = vector.load %arg3[%c0_3, %c0_4] : memref<1x128xbf16, #tpu.memory_space<vmem>>, vector<1x128xbf16>
    %cst = arith.constant dense<0.000000e+00> : vector<128x128xf32>
    %3 = tpu.matmul %0, %1, %cst {dimension_numbers = #tpu.dot_dimension_numbers<[1], [0], [0], [1], [0, 0, 1, 1], [], []>} : vector<128x32xbf16>, vector<32x128xbf16>, vector<128x128xf32> -> vector<128x128xf32>
    %4 = arith.extf %2 : vector<1x128xbf16> to vector<1x128xf32>
    %5 = vector.broadcast %4 : vector<1x128xf32> to vector<128x128xf32>
    %6 = arith.addf %3, %5 : vector<128x128xf32>
    %cst_5 = arith.constant 0.000000e+00 : f32
    %7 = vector.broadcast %cst_5 : f32 to vector<128x128xf32>
    %8 = arith.maximumf %6, %7 : vector<128x128xf32>
    %c0_6 = arith.constant 0 : index
    %c0_7 = arith.constant 0 : index
    %9 = vector.load %arg4[%c0_6, %c0_7] : memref<128x128xbf16, #tpu.memory_space<vmem>>, vector<128x128xbf16>
    %c0_8 = arith.constant 0 : index
    %c0_9 = arith.constant 0 : index
    %10 = vector.load %arg5[%c0_8, %c0_9] : memref<1x128xbf16, #tpu.memory_space<vmem>>, vector<1x128xbf16>
    %cst_10 = arith.constant dense<0.000000e+00> : vector<128x128xf32>
    %11 = tpu.matmul %8, %9, %cst_10 {dimension_numbers = #tpu.dot_dimension_numbers<[1], [0], [0], [1], [0, 0, 1, 1], [], []>} : vector<128x128xf32>, vector<128x128xbf16>, vector<128x128xf32> -> vector<128x128xf32>
    %12 = arith.extf %10 : vector<1x128xbf16> to vector<1x128xf32>
    %13 = vector.broadcast %12 : vector<1x128xf32> to vector<128x128xf32>
    %14 = arith.addf %11, %13 : vector<128x128xf32>
    %cst_11 = arith.constant 0.000000e+00 : f32
    %15 = vector.broadcast %cst_11 : f32 to vector<128x128xf32>
    %16 = arith.maximumf %14, %15 : vector<128x128xf32>
    %c0_12 = arith.constant 0 : index
    %c0_13 = arith.constant 0 : index
    %17 = vector.load %arg6[%c0_12, %c0_13] : memref<128x128xbf16, #tpu.memory_space<vmem>>, vector<128x128xbf16>
    %c0_14 = arith.constant 0 : index
    %c0_15 = arith.constant 0 : index
    %18 = vector.load %arg7[%c0_14, %c0_15] : memref<1x128xbf16, #tpu.memory_space<vmem>>, vector<1x128xbf16>
    %cst_16 = arith.constant dense<0.000000e+00> : vector<128x128xf32>
    %19 = tpu.matmul %16, %17, %cst_16 {dimension_numbers = #tpu.dot_dimension_numbers<[1], [0], [0], [1], [0, 0, 1, 1], [], []>} : vector<128x128xf32>, vector<128x128xbf16>, vector<128x128xf32> -> vector<128x128xf32>
    %20 = arith.extf %18 : vector<1x128xbf16> to vector<1x128xf32>
    %21 = vector.broadcast %20 : vector<1x128xf32> to vector<128x128xf32>
    %22 = arith.addf %19, %21 : vector<128x128xf32>
    %23 = arith.truncf %22 : vector<128x128xf32> to vector<128x128xbf16>
    %c0_17 = arith.constant 0 : index
    %c0_18 = arith.constant 0 : index
    %24 = vector.load %arg8[%c0_17, %c0_18] : memref<128x128xbf16, #tpu.memory_space<vmem>>, vector<128x128xbf16>
    tpu.vector_store %arg8[%c0_17, %c0_18], %23 {strides = array<i32>} : memref<128x128xbf16, #tpu.memory_space<vmem>>, vector<128x128xbf16>,
    return
  }
  func.func @transform_0(%arg0: i32) -> (i32, i32) {
    %c0_i32 = arith.constant 0 : i32
    %c0_i32_0 = arith.constant 0 : i32
    return %arg0, %c0_i32 : i32, i32
  }
  func.func @transform_1(%arg0: i32) -> (i32, i32) {
    %c0_i32 = arith.constant 0 : i32
    %c0_i32_0 = arith.constant 0 : i32
    %c0_i32_1 = arith.constant 0 : i32
    return %c0_i32, %c0_i32_0 : i32, i32
  }
  func.func @transform_2(%arg0: i32) -> (i32, i32) {
    %c0_i32 = arith.constant 0 : i32
    %c0_i32_0 = arith.constant 0 : i32
    %c0_i32_1 = arith.constant 0 : i32
    return %c0_i32, %c0_i32_0 : i32, i32
  }
  func.func @transform_3(%arg0: i32) -> (i32, i32) {
    %c0_i32 = arith.constant 0 : i32
    %c0_i32_0 = arith.constant 0 : i32
    %c0_i32_1 = arith.constant 0 : i32
    return %c0_i32, %c0_i32_0 : i32, i32
  }
  func.func @transform_4(%arg0: i32) -> (i32, i32) {
    %c0_i32 = arith.constant 0 : i32
    %c0_i32_0 = arith.constant 0 : i32
    %c0_i32_1 = arith.constant 0 : i32
    return %c0_i32, %c0_i32_0 : i32, i32
  }
  func.func @transform_5(%arg0: i32) -> (i32, i32) {
    %c0_i32 = arith.constant 0 : i32
    %c0_i32_0 = arith.constant 0 : i32
    %c0_i32_1 = arith.constant 0 : i32
    return %c0_i32, %c0_i32_0 : i32, i32
  }
  func.func @transform_6(%arg0: i32) -> (i32, i32) {
    %c0_i32 = arith.constant 0 : i32
    %c0_i32_0 = arith.constant 0 : i32
    %c0_i32_1 = arith.constant 0 : i32
    return %c0_i32, %c0_i32_0 : i32, i32
  }
  func.func @transform_7(%arg0: i32) -> (i32, i32) {
    %c0_i32 = arith.constant 0 : i32
    %c0_i32_0 = arith.constant 0 : i32
    return %arg0, %c0_i32 : i32, i32
  }
}

</mosaic_0001>

<llo_original>
// kernel: tpu_custom_call.1
$region0: #{tpu_custom_call.1}
  #allocation0 [shape = 'u32[]', space=smem, size = 0x4, offset = 0x4, fixed_abs, tag = 'smem constant byte address 0x4 - core index']
  #allocation1 [shape = 'u32[144,128]{1,0:T(1,128)}', space=vmem, size = 0x12000, scoped, tag = 'internal scratch']
  %s0 = inlined_call_operand.vmem [shape: bf16[256,32], index: 0, kind: input, shape index: {}]
  %s1 = inlined_call_operand.vmem [shape: bf16[32,128], index: 1, kind: input, shape index: {}]
  %s2 = inlined_call_operand.vmem [shape: bf16[1,128], index: 2, kind: input, shape index: {}]
  %s3 = inlined_call_operand.vmem [shape: bf16[128,128], index: 3, kind: input, shape index: {}]
  %s4 = inlined_call_operand.vmem [shape: bf16[1,128], index: 4, kind: input, shape index: {}]
  %s5 = inlined_call_operand.vmem [shape: bf16[128,128], index: 5, kind: input, shape index: {}]
  %s6 = inlined_call_operand.vmem [shape: bf16[1,128], index: 6, kind: input, shape index: {}]
  %s7 = inlined_call_operand.hbm [shape: bf16[256,128], index: 7, kind: output, shape index: {}]
  %s8 = sld [smem:[#allocation0]]
  $region61: #{tpu_custom_call.1} parent=0
    _
  %s10 = ssub.s32 1, %s8
  %s11 = scalar_select 0, %s10, %s8
  $region1: #{tpu_custom_call.1} parent=0
    #allocation2 [shape = 'u8[65536]{0}', space=vmem, size = 0x10000, scoped, tag = 'output window, operand 0']
    #allocation3 [shape = 's32[2]{0}', space=sflag, size = 0x8, scoped, tag = 'scoped memory for tpu_custom_call.1']
    %12 = vsyncpa [#allocation3], 0
    %s13 = scalar_lea.sflag [#allocation3], 1
    %14 = vsyncpa %s13, 0
    loop: start=0, step=1, limit=4
    $region2: #{tpu_custom_call.1} parent=1 // loop_pre_header
      _
    $region3: #{tpu_custom_call.1} parent=1 // loop_header
      %s16 = sphi 0, %s20
      %p17 = scmp.ge.s32.totalorder %s16, 4
      %s26 = sphi 0, %s28
      %s29 = sphi 0, %s26
      %s30 = sphi 0, %s29
      %s46 = sphi 0, %s30
      %s50 = sphi 0, %s50
      %s52 = sphi 0, %s50
      %s53 = sphi 0, %s52
      %s67 = sphi 0, %s53
      %s71 = sphi 0, %s71
      %s73 = sphi 0, %s71
      %s74 = sphi 0, %s73
      %s88 = sphi 0, %s74
      %s92 = sphi 0, %s92
      %s94 = sphi 0, %s92
      %s95 = sphi 0, %s94
      %s109 = sphi 0, %s95
      %s113 = sphi 0, %s113
      %s115 = sphi 0, %s113
      %s116 = sphi 0, %s115
      %s130 = sphi 0, %s116
      %s134 = sphi 0, %s134
      %s136 = sphi 0, %s134
      %s137 = sphi 0, %s136
      %s151 = sphi 0, %s137
      %s155 = sphi 0, %s155
      %s157 = sphi 0, %s155
      %s158 = sphi 0, %s157
      %s172 = sphi 0, %s158
      %s178 = sphi 0, %s180
      %s181 = sphi 0, %s178
      %s182 = sphi 0, %s181
      %s198 = sphi 0, %s182
    $region4: #{tpu_custom_call.1} parent=1 // loop_header_branch
      %19 = sbr.rel (%p17) target = $region8
    $region5: #{tpu_custom_call.1} parent=1 // loop_body
      %s21 = ssub.s32 %s16, 1
      %s22 = ssub.s32 %s16, 2
      %s23 = sadd.s32 %s16, 1
      %s24 = ssub.s32 %s16, %s23
      %p25 = scmp.eq.s32.totalorder %s24, 0
      %s27 = sadd.s32 %s26, 1
      %s28 = scalar_select %p25, %s26, %s27
      %p31 = pneg %p25
      %p32 = scmp.eq.s32.totalorder %s16, 1
      %p33 = por %p31, %p32
      %p34 = scmp.ne.s32.totalorder %s26, %s29
      %p35 = scmp.eq.s32.totalorder %s16, 0
      %p36 = por %p34, %p35
      %p37 = scmp.ne.s32.totalorder %s26, %s29
      %p38 = scmp.eq.s32.totalorder %s21, 1
      %p39 = por %p37, %p38
      %p40 = scmp.ne.s32.totalorder %s29, %s30
      %p41 = scmp.eq.s32.totalorder %s21, 0
      %p42 = por %p40, %p41
      %p43 = scmp.ne.s32.totalorder %s29, %s30
      %p44 = scmp.eq.s32.totalorder %s22, 1
      %p45 = por %p43, %p44
      %p47 = scmp.ne.s32.totalorder %s30, %s46
      %p48 = scmp.eq.s32.totalorder %s22, 0
      %p49 = por %p47, %p48
      %s51 = sadd.s32 %s50, 1
      %p54 = scmp.eq.s32.totalorder %s16, 1
      %p55 = scmp.ne.s32.totalorder %s50, %s52
      %p56 = scmp.eq.s32.totalorder %s16, 0
      %p57 = por %p55, %p56
      %p58 = scmp.ne.s32.totalorder %s50, %s52
      %p59 = scmp.eq.s32.totalorder %s21, 1
      %p60 = por %p58, %p59
      %p61 = scmp.ne.s32.totalorder %s52, %s53
      %p62 = scmp.eq.s32.totalorder %s21, 0
      %p63 = por %p61, %p62
      %p64 = scmp.ne.s32.totalorder %s52, %s53
      %p65 = scmp.eq.s32.totalorder %s22, 1
      %p66 = por %p64, %p65
      %p68 = scmp.ne.s32.totalorder %s53, %s67
      %p69 = scmp.eq.s32.totalorder %s22, 0
      %p70 = por %p68, %p69
      %s72 = sadd.s32 %s71, 1
      %p75 = scmp.eq.s32.totalorder %s16, 1
      %p76 = scmp.ne.s32.totalorder %s71, %s73
      %p77 = scmp.eq.s32.totalorder %s16, 0
      %p78 = por %p76, %p77
      %p79 = scmp.ne.s32.totalorder %s71, %s73
      %p80 = scmp.eq.s32.totalorder %s21, 1
      %p81 = por %p79, %p80
      %p82 = scmp.ne.s32.totalorder %s73, %s74
      %p83 = scmp.eq.s32.totalorder %s21, 0
      %p84 = por %p82, %p83
      %p85 = scmp.ne.s32.totalorder %s73, %s74
      %p86 = scmp.eq.s32.totalorder %s22, 1
      %p87 = por %p85, %p86
      %p89 = scmp.ne.s32.totalorder %s74, %s88
      %p90 = scmp.eq.s32.totalorder %s22, 0
      %p91 = por %p89, %p90
      %s93 = sadd.s32 %s92, 1
      %p96 = scmp.eq.s32.totalorder %s16, 1
      %p97 = scmp.ne.s32.totalorder %s92, %s94
      %p98 = scmp.eq.s32.totalorder %s16, 0
      %p99 = por %p97, %p98
      %p100 = scmp.ne.s32.totalorder %s92, %s94
      %p101 = scmp.eq.s32.totalorder %s21, 1
      %p102 = por %p100, %p101
      %p103 = scmp.ne.s32.totalorder %s94, %s95
      %p104 = scmp.eq.s32.totalorder %s21, 0
      %p105 = por %p103, %p104
      %p106 = scmp.ne.s32.totalorder %s94, %s95
      %p107 = scmp.eq.s32.totalorder %s22, 1
      %p108 = por %p106, %p107
      %p110 = scmp.ne.s32.totalorder %s95, %s109
      %p111 = scmp.eq.s32.totalorder %s22, 0
      %p112 = por %p110, %p111
      %s114 = sadd.s32 %s113, 1
      %p117 = scmp.eq.s32.totalorder %s16, 1
      %p118 = scmp.ne.s32.totalorder %s113, %s115
      %p119 = scmp.eq.s32.totalorder %s16, 0
      %p120 = por %p118, %p119
      %p121 = scmp.ne.s32.totalorder %s113, %s115
      %p122 = scmp.eq.s32.totalorder %s21, 1
      %p123 = por %p121, %p122
      %p124 = scmp.ne.s32.totalorder %s115, %s116
      %p125 = scmp.eq.s32.totalorder %s21, 0
      %p126 = por %p124, %p125
      %p127 = scmp.ne.s32.totalorder %s115, %s116
      %p128 = scmp.eq.s32.totalorder %s22, 1
      %p129 = por %p127, %p128
      %p131 = scmp.ne.s32.totalorder %s116, %s130
      %p132 = scmp.eq.s32.totalorder %s22, 0
      %p133 = por %p131, %p132
      %s135 = sadd.s32 %s134, 1
      %p138 = scmp.eq.s32.totalorder %s16, 1
      %p139 = scmp.ne.s32.totalorder %s134, %s136
      %p140 = scmp.eq.s32.totalorder %s16, 0
      %p141 = por %p139, %p140
      %p142 = scmp.ne.s32.totalorder %s134, %s136
      %p143 = scmp.eq.s32.totalorder %s21, 1
      %p144 = por %p142, %p143
      %p145 = scmp.ne.s32.totalorder %s136, %s137
      %p146 = scmp.eq.s32.totalorder %s21, 0
      %p147 = por %p145, %p146
      %p148 = scmp.ne.s32.totalorder %s136, %s137
      %p149 = scmp.eq.s32.totalorder %s22, 1
      %p150 = por %p148, %p149
      %p152 = scmp.ne.s32.totalorder %s137, %s151
      %p153 = scmp.eq.s32.totalorder %s22, 0
      %p154 = por %p152, %p153
      %s156 = sadd.s32 %s155, 1
      %p159 = scmp.eq.s32.totalorder %s16, 1
      %p160 = scmp.ne.s32.totalorder %s155, %s157
      %p161 = scmp.eq.s32.totalorder %s16, 0
      %p162 = por %p160, %p161
      %p163 = scmp.ne.s32.totalorder %s155, %s157
      %p164 = scmp.eq.s32.totalorder %s21, 1
      %p165 = por %p163, %p164
      %p166 = scmp.ne.s32.totalorder %s157, %s158
      %p167 = scmp.eq.s32.totalorder %s21, 0
      %p168 = por %p166, %p167
      %p169 = scmp.ne.s32.totalorder %s157, %s158
      %p170 = scmp.eq.s32.totalorder %s22, 1
      %p171 = por %p169, %p170
      %p173 = scmp.ne.s32.totalorder %s158, %s172
      %p174 = scmp.eq.s32.totalorder %s22, 0
      %p175 = por %p173, %p174
      %s176 = ssub.s32 %s16, %s23
      %p177 = scmp.eq.s32.totalorder %s176, 0
      %s179 = sadd.s32 %s178, 1
      %s180 = scalar_select %p177, %s178, %s179
      %p183 = pneg %p177
      %p184 = scmp.eq.s32.totalorder %s16, 1
      %p185 = por %p183, %p184
      %p186 = scmp.ne.s32.totalorder %s178, %s181
      %p187 = scmp.eq.s32.totalorder %s16, 0
      %p188 = por %p186, %p187
      %p189 = scmp.ne.s32.totalorder %s178, %s181
      %p190 = scmp.eq.s32.totalorder %s21, 1
      %p191 = por %p189, %p190
      %p192 = scmp.ne.s32.totalorder %s181, %s182
      %p193 = scmp.eq.s32.totalorder %s21, 0
      %p194 = por %p192, %p193
      %p195 = scmp.ne.s32.totalorder %s181, %s182
      %p196 = scmp.eq.s32.totalorder %s22, 1
      %p197 = por %p195, %p196
      %p199 = scmp.ne.s32.totalorder %s182, %s198
      %p200 = scmp.eq.s32.totalorder %s22, 0
      %p201 = por %p199, %p200
      %p202 = scmp.le.s32.totalorder 1, %s16
      %p203 = scmp.lt.s32.totalorder %s16, 3
      %p204 = pnand %p202, %p203
      %p205 = pneg %p204
      // Predicated region
      $region9: #{tpu_custom_call.1} parent=5 // pred_check
        _
      $region10: #{tpu_custom_call.1} parent=5 // pred_check_branch
        %207 = sbr.rel (%p204) target = $region12
      $region11: #{tpu_custom_call.1} parent=5 // pred_region
        %s208 = ssub.s32 %s16, 1
        // Predicated region
        $region13: #{tpu_custom_call.1} parent=11 // pred_check
          %p209 = pneg %p63
        $region14: #{tpu_custom_call.1} parent=11 // pred_check_branch
          %211 = sbr.rel (%p209) target = $region16
        $region15: #{tpu_custom_call.1} parent=11 // pred_region
          _
        $region16: #{tpu_custom_call.1} parent=11 // pred_fallthru
          _
        // Predicated region
        $region17: #{tpu_custom_call.1} parent=11 // pred_check
          %p212 = pneg %p84
        $region18: #{tpu_custom_call.1} parent=11 // pred_check_branch
          %214 = sbr.rel (%p212) target = $region20
        $region19: #{tpu_custom_call.1} parent=11 // pred_region
          _
        $region20: #{tpu_custom_call.1} parent=11 // pred_fallthru
          _
        // Predicated region
        $region21: #{tpu_custom_call.1} parent=11 // pred_check
          %p215 = pneg %p105
        $region22: #{tpu_custom_call.1} parent=11 // pred_check_branch
          %217 = sbr.rel (%p215) target = $region24
        $region23: #{tpu_custom_call.1} parent=11 // pred_region
          _
        $region24: #{tpu_custom_call.1} parent=11 // pred_fallthru
          _
        // Predicated region
        $region25: #{tpu_custom_call.1} parent=11 // pred_check
          %p218 = pneg %p126
        $region26: #{tpu_custom_call.1} parent=11 // pred_check_branch
          %220 = sbr.rel (%p218) target = $region28
        $region27: #{tpu_custom_call.1} parent=11 // pred_region
          _
        $region28: #{tpu_custom_call.1} parent=11 // pred_fallthru
          _
        // Predicated region
        $region29: #{tpu_custom_call.1} parent=11 // pred_check
          %p221 = pneg %p147
        $region30: #{tpu_custom_call.1} parent=11 // pred_check_branch
          %223 = sbr.rel (%p221) target = $region32
        $region31: #{tpu_custom_call.1} parent=11 // pred_region
          _
        $region32: #{tpu_custom_call.1} parent=11 // pred_fallthru
          _
        // Predicated region
        $region33: #{tpu_custom_call.1} parent=11 // pred_check
          %p224 = pneg %p168
        $region34: #{tpu_custom_call.1} parent=11 // pred_check_branch
          %226 = sbr.rel (%p224) target = $region36
        $region35: #{tpu_custom_call.1} parent=11 // pred_region
          _
        $region36: #{tpu_custom_call.1} parent=11 // pred_fallthru
          _
      $region12: #{tpu_custom_call.1} parent=5 // pred_fallthru
        _
      %p227 = scmp.lt.s32.totalorder %s16, 2
      // Predicated region
      $region37: #{tpu_custom_call.1} parent=5 // pred_check
        %p228 = pneg %p227
      $region38: #{tpu_custom_call.1} parent=5 // pred_check_branch
        %230 = sbr.rel (%p228) target = $region40
      $region39: #{tpu_custom_call.1} parent=5 // pred_region
        // Predicated region
        $region41: #{tpu_custom_call.1} parent=39 // pred_check
          %p231 = pneg %p36
        $region42: #{tpu_custom_call.1} parent=39 // pred_check_branch
          %233 = sbr.rel (%p231) target = $region44
        $region43: #{tpu_custom_call.1} parent=39 // pred_region
          %s234 = smul.u32 16, %s16
          %p235 = scmp.lt.s32.totalorder %s234, 31
          %s236 = scalar_select %p235, %s234, 31
          %s237 = smul.addr %s236, 4
          %s238 = scalar_lea.vmem %s0, %s237
          %s239 = smul.u32 16, %s16
        $region44: #{tpu_custom_call.1} parent=39 // pred_fallthru
          _
      $region40: #{tpu_custom_call.1} parent=5 // pred_fallthru
        _
      %p240 = scmp.le.s32.totalorder 1, %s16
      %p241 = scmp.lt.s32.totalorder %s16, 3
      %p242 = pnand %p240, %p241
      %p243 = pneg %p242
      // Predicated region
      $region45: #{tpu_custom_call.1} parent=5 // pred_check
        _
      $region46: #{tpu_custom_call.1} parent=5 // pred_check_branch
        %245 = sbr.rel (%p242) target = $region48
      $region47: #{tpu_custom_call.1} parent=5 // pred_region
        %s246 = ssub.s32 %s16, 1
        %s247 = smul.u32 16, %s21
        %p248 = scmp.lt.s32.totalorder %s247, 31
        %s249 = scalar_select %p248, %s247, 31
        %s250 = smul.addr %s249, 4
        %s251 = scalar_lea.vmem %s0, %s250
        %p252 = pneg %p42
        %p253 = pneg %p39
        %p254 = pneg %p63
        %p255 = pneg %p60
        %p256 = pneg %p84
        %p257 = pneg %p81
        %p258 = pneg %p105
        %p259 = pneg %p102
        %p260 = pneg %p126
        %p261 = pneg %p123
        %p262 = pneg %p147
        %p263 = pneg %p144
        %p264 = pneg %p168
        %p265 = pneg %p165
        %p266 = pneg %p194
        %p267 = pneg %p191
        %s268 = sand.u32 %s181, 1
        %s269 = scalar_lea.sflag [#allocation3], %s268
        %s270 = sand.u32 %s181, 1
        %s271 = smul.addr %s270, 64
        %s272 = scalar_lea.vmem [#allocation2], %s271
        %s273 = smul.u32 16, %s21
        %p274 = scmp.lt.s32.totalorder %s273, 31
        %s275 = scalar_select %p274, %s273, 31
        %s276 = smul.addr %s275, 4
        %s277 = scalar_lea.vmem %s0, %s276
        %s278 = smul.u32 16, %s21
        %s279 = smul.u32 16, %s21
        %v281 = vld [vmem:[%s277] sm:$0xf]
        %v282 = vld [vmem:[%s277 + $0x4] sm:$0xf]
        %v283 = vld [vmem:[%s277 + $0x8] sm:$0xf]
        %v284 = vld [vmem:[%s277 + $0xc] sm:$0xf]
        %v285 = vld [vmem:[%s277 + $0x10] sm:$0xf]
        %v286 = vld [vmem:[%s277 + $0x14] sm:$0xf]
        %v287 = vld [vmem:[%s277 + $0x18] sm:$0xf]
        %v288 = vld [vmem:[%s277 + $0x1c] sm:$0xf]
        %v289 = vld [vmem:[%s277 + $0x20] sm:$0xf]
        %v290 = vld [vmem:[%s277 + $0x24] sm:$0xf]
        %v291 = vld [vmem:[%s277 + $0x28] sm:$0xf]
        %v292 = vld [vmem:[%s277 + $0x2c] sm:$0xf]
        %v293 = vld [vmem:[%s277 + $0x30] sm:$0xf]
        %v294 = vld [vmem:[%s277 + $0x34] sm:$0xf]
        %v295 = vld [vmem:[%s277 + $0x38] sm:$0xf]
        %v296 = vld [vmem:[%s277 + $0x3c] sm:$0xf]
        %v297 = vld [vmem:[%s1] sm:$0xf]
        %v298 = vld [vmem:[%s1 + $0x4] sm:$0xf]
        %v299 = vld [vmem:[%s1 + $0x8] sm:$0xf]
        %v300 = vld [vmem:[%s1 + $0xc] sm:$0xf]
        %v301 = vld [vmem:[%s2] sm:$0x1]
        %v302 = vunpack.c.l.bf16 %v301
        %v303 = vlaneseq
        %v304 = vshrl.u32 %v303, 7
        %v305 = vsub.s32 0, %v304
        %v306 = vrot.slane %v302, %v305
        %v323 = vunpack.c.l.b16 %v281
        %v324 = vunpack.c.l.b16 %v282
        %v325 = vunpack.c.l.b16 %v283
        %v326 = vunpack.c.l.b16 %v284
        %v327 = vunpack.c.l.b16 %v285
        %v328 = vunpack.c.l.b16 %v286
        %v329 = vunpack.c.l.b16 %v287
        %v330 = vunpack.c.l.b16 %v288
        %v331 = vunpack.c.l.b16 %v289
        %v332 = vunpack.c.l.b16 %v290
        %v333 = vunpack.c.l.b16 %v291
        %v334 = vunpack.c.l.b16 %v292
        %v335 = vunpack.c.l.b16 %v293
        %v336 = vunpack.c.l.b16 %v294
        %v337 = vunpack.c.l.b16 %v295
        %v338 = vunpack.c.l.b16 %v296
        %v339 = vpack.c.b16 %v324, %v323
        %v340 = vpack.c.b16 %v326, %v325
        %v341 = vpack.c.b16 %v328, %v327
        %v342 = vpack.c.b16 %v330, %v329
        %v343 = vpack.c.b16 %v332, %v331
        %v344 = vpack.c.b16 %v334, %v333
        %v345 = vpack.c.b16 %v336, %v335
        %v346 = vpack.c.b16 %v338, %v337
        %v351 = vunpack.c.l.b16 %v297
        %v352 = vunpack.c.l.b16 %v298
        %v353 = vunpack.c.l.b16 %v299
        %v354 = vunpack.c.l.b16 %v300
        %v355 = vpack.c.b16 %v352, %v351
        %v356 = vpack.c.b16 %v354, %v353
        %vm359 = vcmask 261120
        %v361 = vsel %vm359, %v339, 0
        %v364 = vsel %vm359, %v340, 0
        %v367 = vsel %vm359, %v341, 0
        %v370 = vsel %vm359, %v342, 0
        %v373 = vsel %vm359, %v343, 0
        %v376 = vsel %vm359, %v344, 0
        %v379 = vsel %vm359, %v345, 0
        %v382 = vsel %vm359, %v346, 0
        %384 = vmatprep.subr.bf16.mxu0 0
        %385 = vmatpush1.bf16.msra.mxu0 0
        %386 = vmatprep.subr.bf16.mxu0 0
        %387 = vmatpush1.bf16.msra.mxu0 0
        %388 = vmatprep.subr.bf16.mxu0 0
        %389 = vmatpush1.bf16.msra.mxu0 0
        %390 = vmatprep.subr.bf16.mxu0 0
        %391 = vmatpush1.bf16.msra.mxu0 0
        %392 = vmatprep.subr.bf16.mxu0 0
        %393 = vmatpush1.bf16.msra.mxu0 0
        %394 = vmatprep.subr.bf16.mxu0 0
        %395 = vmatpush1.bf16.msra.mxu0 0
        %396 = vmatprep.subr.bf16.mxu0 0
        %397 = vmatpush1.bf16.msra.mxu0 %v356
        %398 = vmatprep.subr.bf16.mxu0 0
        %399 = vmatpush1.bf16.msra.mxu0 %v355
        %400 = vmatprep.subr.bf16.mxu0 0
        %401 = vmatpush2.bf16.msra.mxu0 0
        %402 = vmatprep.subr.bf16.mxu0 0
        %403 = vmatpush2.bf16.msra.mxu0 0
        %404 = vmatprep.subr.bf16.mxu0 0
        %405 = vmatpush2.bf16.msra.mxu0 0
        %406 = vmatprep.subr.bf16.mxu0 0
        %407 = vmatpush2.bf16.msra.mxu0 0
        %408 = vmatprep.subr.bf16.mxu0 0
        %409 = vmatpush2.bf16.msra.mxu0 0
        %410 = vmatprep.subr.bf16.mxu0 0
        %411 = vmatpush2.bf16.msra.mxu0 0
        %412 = vmatprep.subr.bf16.mxu0 0
        %413 = vmatpush2.bf16.msra.mxu0 0
        %414 = vmatprep.subr.bf16.mxu0 0
        %415 = vmatpush2.bf16.msra.mxu0 0
        %416 = vmatprep.mubr.bf16.mxu0 0
        %417 = vmatmul.mubr.bf16.gmra.mxu0 %v361
        %v418 = vpop.f32.mrf.mxu0
        %v419 = vadd.f32 %v306, %v418
        %v420 = vpop.f32.mrf.mxu0
        %v421 = vpop.f32.mrf.mxu0
        %v422 = vadd.f32 %v306, %v421
        %v423 = vpop.f32.mrf.mxu0
        %424 = vmatprep.mubr.bf16.mxu0 0
        %425 = vmatmul.mubr.bf16.gmra.mxu0 %v364
        %v426 = vpop.f32.mrf.mxu0
        %v427 = vadd.f32 %v306, %v426
        %v428 = vpop.f32.mrf.mxu0
        %v429 = vpop.f32.mrf.mxu0
        %v430 = vadd.f32 %v306, %v429
        %v431 = vpop.f32.mrf.mxu0
        %432 = vmatprep.mubr.bf16.mxu0 0
        %433 = vmatmul.mubr.bf16.gmra.mxu0 %v367
        %v434 = vpop.f32.mrf.mxu0
        %v435 = vadd.f32 %v306, %v434
        %v436 = vpop.f32.mrf.mxu0
        %v437 = vpop.f32.mrf.mxu0
        %v438 = vadd.f32 %v306, %v437
        %v439 = vpop.f32.mrf.mxu0
        %440 = vmatprep.mubr.bf16.mxu0 0
        %441 = vmatmul.mubr.bf16.gmra.mxu0 %v370
        %v442 = vpop.f32.mrf.mxu0
        %v443 = vadd.f32 %v306, %v442
        %v444 = vpop.f32.mrf.mxu0
        %v445 = vpop.f32.mrf.mxu0
        %v446 = vadd.f32 %v306, %v445
        %v447 = vpop.f32.mrf.mxu0
        %448 = vmatprep.mubr.bf16.mxu0 0
        %449 = vmatmul.mubr.bf16.gmra.mxu0 %v373
        %v450 = vpop.f32.mrf.mxu0
        %v451 = vadd.f32 %v306, %v450
        %v452 = vpop.f32.mrf.mxu0
        %v453 = vpop.f32.mrf.mxu0
        %v454 = vadd.f32 %v306, %v453
        %v455 = vpop.f32.mrf.mxu0
        %456 = vmatprep.mubr.bf16.mxu0 0
        %457 = vmatmul.mubr.bf16.gmra.mxu0 %v376
        %v458 = vpop.f32.mrf.mxu0
        %v459 = vadd.f32 %v306, %v458
        %v460 = vpop.f32.mrf.mxu0
        %v461 = vpop.f32.mrf.mxu0
        %v462 = vadd.f32 %v306, %v461
        %v463 = vpop.f32.mrf.mxu0
        %464 = vmatprep.mubr.bf16.mxu0 0
        %465 = vmatmul.mubr.bf16.gmra.mxu0 %v379
        %v466 = vpop.f32.mrf.mxu0
        %v467 = vadd.f32 %v306, %v466
        %v468 = vpop.f32.mrf.mxu0
        %v469 = vpop.f32.mrf.mxu0
        %v470 = vadd.f32 %v306, %v469
        %v471 = vpop.f32.mrf.mxu0
        %472 = vmatprep.mubr.bf16.mxu0 0
        %473 = vmatmul.mubr.bf16.gmra.mxu0 %v382
        %v474 = vpop.f32.mrf.mxu0
        %v475 = vadd.f32 %v306, %v474
        %v476 = vpop.f32.mrf.mxu0
        %v477 = vpop.f32.mrf.mxu0
        %v478 = vadd.f32 %v306, %v477
        %v479 = vpop.f32.mrf.mxu0
        %480 = vdwg.mxu0
        %v481 = vmax.f32 %v419, 0.0
        %v482 = vmax.f32 %v422, 0.0
        %v483 = vmax.f32 %v427, 0.0
        %v484 = vmax.f32 %v430, 0.0
        %v485 = vmax.f32 %v435, 0.0
        %v486 = vmax.f32 %v438, 0.0
        %v487 = vmax.f32 %v443, 0.0
        %v488 = vmax.f32 %v446, 0.0
        %v489 = vmax.f32 %v451, 0.0
        %v490 = vmax.f32 %v454, 0.0
        %v491 = vmax.f32 %v459, 0.0
        %v492 = vmax.f32 %v462, 0.0
        %v493 = vmax.f32 %v467, 0.0
        %v494 = vmax.f32 %v470, 0.0
        %v495 = vmax.f32 %v475, 0.0
        %v496 = vmax.f32 %v478, 0.0
        %v497 = vld [vmem:[%s3] sm:$0xf]
        %v498 = vld [vmem:[%s3 + $0x4] sm:$0xf]
        %v499 = vld [vmem:[%s3 + $0x8] sm:$0xf]
        %v500 = vld [vmem:[%s3 + $0xc] sm:$0xf]
        %v501 = vld [vmem:[%s3 + $0x10] sm:$0xf]
        %v502 = vld [vmem:[%s3 + $0x14] sm:$0xf]
        %v503 = vld [vmem:[%s3 + $0x18] sm:$0xf]
        %v504 = vld [vmem:[%s3 + $0x1c] sm:$0xf]
        %v505 = vld [vmem:[%s3 + $0x20] sm:$0xf]
        %v506 = vld [vmem:[%s3 + $0x24] sm:$0xf]
        %v507 = vld [vmem:[%s3 + $0x28] sm:$0xf]
        %v508 = vld [vmem:[%s3 + $0x2c] sm:$0xf]
        %v509 = vld [vmem:[%s3 + $0x30] sm:$0xf]
        %v510 = vld [vmem:[%s3 + $0x34] sm:$0xf]
        %v511 = vld [vmem:[%s3 + $0x38] sm:$0xf]
        %v512 = vld [vmem:[%s3 + $0x3c] sm:$0xf]
        %v513 = vld [vmem:[%s4] sm:$0x1]
        %v514 = vunpack.c.l.bf16 %v513
        %v515 = vlaneseq
        %v516 = vshrl.u32 %v515, 7
        %v517 = vsub.s32 0, %v516
        %v518 = vrot.slane %v514, %v517
        %v535 = vunpack.c.l.b16 %v497
        %v536 = vunpack.c.l.b16 %v498
        %v537 = vunpack.c.l.b16 %v499
        %v538 = vunpack.c.l.b16 %v500
        %v539 = vunpack.c.l.b16 %v501
        %v540 = vunpack.c.l.b16 %v502
        %v541 = vunpack.c.l.b16 %v503
        %v542 = vunpack.c.l.b16 %v504
        %v543 = vunpack.c.l.b16 %v505
        %v544 = vunpack.c.l.b16 %v506
        %v545 = vunpack.c.l.b16 %v507
        %v546 = vunpack.c.l.b16 %v508
        %v547 = vunpack.c.l.b16 %v509
        %v548 = vunpack.c.l.b16 %v510
        %v549 = vunpack.c.l.b16 %v511
        %v550 = vunpack.c.l.b16 %v512
        %v551 = vpack.c.b16 %v536, %v535
        %v552 = vpack.c.b16 %v538, %v537
        %v553 = vpack.c.b16 %v540, %v539
        %v554 = vpack.c.b16 %v542, %v541
        %v555 = vpack.c.b16 %v544, %v543
        %v556 = vpack.c.b16 %v546, %v545
        %v557 = vpack.c.b16 %v548, %v547
        %v558 = vpack.c.b16 %v550, %v549
        %567 = vmatprep.subr.bf16.mxu0 0
        %568 = vmatpush1.bf16.msra.mxu0 %v558
        %569 = vmatprep.subr.bf16.mxu0 0
        %570 = vmatpush1.bf16.msra.mxu0 %v557
        %571 = vmatprep.subr.bf16.mxu0 0
        %572 = vmatpush1.bf16.msra.mxu0 %v556
        %573 = vmatprep.subr.bf16.mxu0 0
        %574 = vmatpush1.bf16.msra.mxu0 %v555
        %575 = vmatprep.subr.bf16.mxu0 0
        %576 = vmatpush1.bf16.msra.mxu0 %v554
        %577 = vmatprep.subr.bf16.mxu0 0
        %578 = vmatpush1.bf16.msra.mxu0 %v553
        %579 = vmatprep.subr.bf16.mxu0 0
        %580 = vmatpush1.bf16.msra.mxu0 %v552
        %581 = vmatprep.subr.bf16.mxu0 0
        %582 = vmatpush1.bf16.msra.mxu0 %v551
        %583 = vmatprep.subr.bf16.mxu0 0
        %584 = vmatpush2.bf16.msra.mxu0 0
        %585 = vmatprep.subr.bf16.mxu0 0
        %586 = vmatpush2.bf16.msra.mxu0 0
        %587 = vmatprep.subr.bf16.mxu0 0
        %588 = vmatpush2.bf16.msra.mxu0 0
        %589 = vmatprep.subr.bf16.mxu0 0
        %590 = vmatpush2.bf16.msra.mxu0 0
        %591 = vmatprep.subr.bf16.mxu0 0
        %592 = vmatpush2.bf16.msra.mxu0 0
        %593 = vmatprep.subr.bf16.mxu0 0
        %594 = vmatpush2.bf16.msra.mxu0 0
        %595 = vmatprep.subr.bf16.mxu0 0
        %596 = vmatpush2.bf16.msra.mxu0 0
        %597 = vmatprep.subr.bf16.mxu0 0
        %598 = vmatpush2.bf16.msra.mxu0 0
        %599 = vmatprep.mubr.f32.mxu0 0.0
        %600 = vmatmul.mubr.f32.gmra.mxu0 %v481
        %v601 = vpop.f32.mrf.mxu0
        %v602 = vadd.f32 %v518, %v601
        %v603 = vpop.f32.mrf.mxu0
        %604 = vmatprep.mubr.f32.mxu0 0.0
        %605 = vmatmul.mubr.f32.gmra.mxu0 %v482
        %v606 = vpop.f32.mrf.mxu0
        %v607 = vadd.f32 %v518, %v606
        %v608 = vpop.f32.mrf.mxu0
        %609 = vmatprep.mubr.f32.mxu0 0.0
        %610 = vmatmul.mubr.f32.gmra.mxu0 %v483
        %v611 = vpop.f32.mrf.mxu0
        %v612 = vadd.f32 %v518, %v611
        %v613 = vpop.f32.mrf.mxu0
        %614 = vmatprep.mubr.f32.mxu0 0.0
        %615 = vmatmul.mubr.f32.gmra.mxu0 %v484
        %v616 = vpop.f32.mrf.mxu0
        %v617 = vadd.f32 %v518, %v616
        %v618 = vpop.f32.mrf.mxu0
        %619 = vmatprep.mubr.f32.mxu0 0.0
        %620 = vmatmul.mubr.f32.gmra.mxu0 %v485
        %v621 = vpop.f32.mrf.mxu0
        %v622 = vadd.f32 %v518, %v621
        %v623 = vpop.f32.mrf.mxu0
        %624 = vmatprep.mubr.f32.mxu0 0.0
        %625 = vmatmul.mubr.f32.gmra.mxu0 %v486
        %v626 = vpop.f32.mrf.mxu0
        %v627 = vadd.f32 %v518, %v626
        %v628 = vpop.f32.mrf.mxu0
        %629 = vmatprep.mubr.f32.mxu0 0.0
        %630 = vmatmul.mubr.f32.gmra.mxu0 %v487
        %v631 = vpop.f32.mrf.mxu0
        %v632 = vadd.f32 %v518, %v631
        %v633 = vpop.f32.mrf.mxu0
        %634 = vmatprep.mubr.f32.mxu0 0.0
        %635 = vmatmul.mubr.f32.gmra.mxu0 %v488
        %v636 = vpop.f32.mrf.mxu0
        %v637 = vadd.f32 %v518, %v636
        %v638 = vpop.f32.mrf.mxu0
        %639 = vmatprep.mubr.f32.mxu0 0.0
        %640 = vmatmul.mubr.f32.gmra.mxu0 %v489
        %v641 = vpop.f32.mrf.mxu0
        %v642 = vadd.f32 %v518, %v641
        %v643 = vpop.f32.mrf.mxu0
        %644 = vmatprep.mubr.f32.mxu0 0.0
        %645 = vmatmul.mubr.f32.gmra.mxu0 %v490
        %v646 = vpop.f32.mrf.mxu0
        %v647 = vadd.f32 %v518, %v646
        %v648 = vpop.f32.mrf.mxu0
        %649 = vmatprep.mubr.f32.mxu0 0.0
        %650 = vmatmul.mubr.f32.gmra.mxu0 %v491
        %v651 = vpop.f32.mrf.mxu0
        %v652 = vadd.f32 %v518, %v651
        %v653 = vpop.f32.mrf.mxu0
        %654 = vmatprep.mubr.f32.mxu0 0.0
        %655 = vmatmul.mubr.f32.gmra.mxu0 %v492
        %v656 = vpop.f32.mrf.mxu0
        %v657 = vadd.f32 %v518, %v656
        %v658 = vpop.f32.mrf.mxu0
        %659 = vmatprep.mubr.f32.mxu0 0.0
        %660 = vmatmul.mubr.f32.gmra.mxu0 %v493
        %v661 = vpop.f32.mrf.mxu0
        %v662 = vadd.f32 %v518, %v661
        %v663 = vpop.f32.mrf.mxu0
        %664 = vmatprep.mubr.f32.mxu0 0.0
        %665 = vmatmul.mubr.f32.gmra.mxu0 %v494
        %v666 = vpop.f32.mrf.mxu0
        %v667 = vadd.f32 %v518, %v666
        %v668 = vpop.f32.mrf.mxu0
        %669 = vmatprep.mubr.f32.mxu0 0.0
        %670 = vmatmul.mubr.f32.gmra.mxu0 %v495
        %v671 = vpop.f32.mrf.mxu0
        %v672 = vadd.f32 %v518, %v671
        %v673 = vpop.f32.mrf.mxu0
        %674 = vmatprep.mubr.f32.mxu0 0.0
        %675 = vmatmul.mubr.f32.gmra.mxu0 %v496
        %v676 = vpop.f32.mrf.mxu0
        %v677 = vadd.f32 %v518, %v676
        %v678 = vpop.f32.mrf.mxu0
        %679 = vdwg.mxu0
        %v680 = vmax.f32 %v602, 0.0
        %v681 = vmax.f32 %v607, 0.0
        %v682 = vmax.f32 %v612, 0.0
        %v683 = vmax.f32 %v617, 0.0
        %v684 = vmax.f32 %v622, 0.0
        %v685 = vmax.f32 %v627, 0.0
        %v686 = vmax.f32 %v632, 0.0
        %v687 = vmax.f32 %v637, 0.0
        %v688 = vmax.f32 %v642, 0.0
        %v689 = vmax.f32 %v647, 0.0
        %v690 = vmax.f32 %v652, 0.0
        %v691 = vmax.f32 %v657, 0.0
        %v692 = vmax.f32 %v662, 0.0
        %v693 = vmax.f32 %v667, 0.0
        %v694 = vmax.f32 %v672, 0.0
        %v695 = vmax.f32 %v677, 0.0
        %v696 = vld [vmem:[%s5] sm:$0xf]
        %v697 = vld [vmem:[%s5 + $0x4] sm:$0xf]
        %v698 = vld [vmem:[%s5 + $0x8] sm:$0xf]
        %v699 = vld [vmem:[%s5 + $0xc] sm:$0xf]
        %v700 = vld [vmem:[%s5 + $0x10] sm:$0xf]
        %v701 = vld [vmem:[%s5 + $0x14] sm:$0xf]
        %v702 = vld [vmem:[%s5 + $0x18] sm:$0xf]
        %v703 = vld [vmem:[%s5 + $0x1c] sm:$0xf]
        %v704 = vld [vmem:[%s5 + $0x20] sm:$0xf]
        %v705 = vld [vmem:[%s5 + $0x24] sm:$0xf]
        %v706 = vld [vmem:[%s5 + $0x28] sm:$0xf]
        %v707 = vld [vmem:[%s5 + $0x2c] sm:$0xf]
        %v708 = vld [vmem:[%s5 + $0x30] sm:$0xf]
        %v709 = vld [vmem:[%s5 + $0x34] sm:$0xf]
        %v710 = vld [vmem:[%s5 + $0x38] sm:$0xf]
        %v711 = vld [vmem:[%s5 + $0x3c] sm:$0xf]
        %v712 = vld [vmem:[%s6] sm:$0x1]
        %v713 = vunpack.c.l.bf16 %v712
        %v714 = vlaneseq
        %v715 = vshrl.u32 %v714, 7
        %v716 = vsub.s32 0, %v715
        %v717 = vrot.slane %v713, %v716
        %v734 = vunpack.c.l.b16 %v696
        %v735 = vunpack.c.l.b16 %v697
        %v736 = vunpack.c.l.b16 %v698
        %v737 = vunpack.c.l.b16 %v699
        %v738 = vunpack.c.l.b16 %v700
        %v739 = vunpack.c.l.b16 %v701
        %v740 = vunpack.c.l.b16 %v702
        %v741 = vunpack.c.l.b16 %v703
        %v742 = vunpack.c.l.b16 %v704
        %v743 = vunpack.c.l.b16 %v705
        %v744 = vunpack.c.l.b16 %v706
        %v745 = vunpack.c.l.b16 %v707
        %v746 = vunpack.c.l.b16 %v708
        %v747 = vunpack.c.l.b16 %v709
        %v748 = vunpack.c.l.b16 %v710
        %v749 = vunpack.c.l.b16 %v711
        %v750 = vpack.c.b16 %v735, %v734
        %v751 = vpack.c.b16 %v737, %v736
        %v752 = vpack.c.b16 %v739, %v738
        %v753 = vpack.c.b16 %v741, %v740
        %v754 = vpack.c.b16 %v743, %v742
        %v755 = vpack.c.b16 %v745, %v744
        %v756 = vpack.c.b16 %v747, %v746
        %v757 = vpack.c.b16 %v749, %v748
        %766 = vmatprep.subr.bf16.mxu0 0
        %767 = vmatpush1.bf16.msra.mxu0 %v757
        %768 = vmatprep.subr.bf16.mxu0 0
        %769 = vmatpush1.bf16.msra.mxu0 %v756
        %770 = vmatprep.subr.bf16.mxu0 0
        %771 = vmatpush1.bf16.msra.mxu0 %v755
        %772 = vmatprep.subr.bf16.mxu0 0
        %773 = vmatpush1.bf16.msra.mxu0 %v754
        %774 = vmatprep.subr.bf16.mxu0 0
        %775 = vmatpush1.bf16.msra.mxu0 %v753
        %776 = vmatprep.subr.bf16.mxu0 0
        %777 = vmatpush1.bf16.msra.mxu0 %v752
        %778 = vmatprep.subr.bf16.mxu0 0
        %779 = vmatpush1.bf16.msra.mxu0 %v751
        %780 = vmatprep.subr.bf16.mxu0 0
        %781 = vmatpush1.bf16.msra.mxu0 %v750
        %782 = vmatprep.subr.bf16.mxu0 0
        %783 = vmatpush2.bf16.msra.mxu0 0
        %784 = vmatprep.subr.bf16.mxu0 0
        %785 = vmatpush2.bf16.msra.mxu0 0
        %786 = vmatprep.subr.bf16.mxu0 0
        %787 = vmatpush2.bf16.msra.mxu0 0
        %788 = vmatprep.subr.bf16.mxu0 0
        %789 = vmatpush2.bf16.msra.mxu0 0
        %790 = vmatprep.subr.bf16.mxu0 0
        %791 = vmatpush2.bf16.msra.mxu0 0
        %792 = vmatprep.subr.bf16.mxu0 0
        %793 = vmatpush2.bf16.msra.mxu0 0
        %794 = vmatprep.subr.bf16.mxu0 0
        %795 = vmatpush2.bf16.msra.mxu0 0
        %796 = vmatprep.subr.bf16.mxu0 0
        %797 = vmatpush2.bf16.msra.mxu0 0
        %798 = vmatprep.mubr.f32.mxu0 0.0
        %799 = vmatmul.mubr.f32.gmra.mxu0 %v680
        %v800 = vpop.f32.mrf.mxu0
        %v801 = vadd.f32 %v717, %v800
        %v802 = vpop.f32.mrf.mxu0
        %803 = vmatprep.mubr.f32.mxu0 0.0
        %804 = vmatmul.mubr.f32.gmra.mxu0 %v681
        %v805 = vpop.f32.mrf.mxu0
        %v806 = vadd.f32 %v717, %v805
        %v807 = vpop.f32.mrf.mxu0
        %808 = vmatprep.mubr.f32.mxu0 0.0
        %809 = vmatmul.mubr.f32.gmra.mxu0 %v682
        %v810 = vpop.f32.mrf.mxu0
        %v811 = vadd.f32 %v717, %v810
        %v812 = vpop.f32.mrf.mxu0
        %813 = vmatprep.mubr.f32.mxu0 0.0
        %814 = vmatmul.mubr.f32.gmra.mxu0 %v683
        %v815 = vpop.f32.mrf.mxu0
        %v816 = vadd.f32 %v717, %v815
        %v817 = vpop.f32.mrf.mxu0
        %818 = vmatprep.mubr.f32.mxu0 0.0
        %819 = vmatmul.mubr.f32.gmra.mxu0 %v684
        %v820 = vpop.f32.mrf.mxu0
        %v821 = vadd.f32 %v717, %v820
        %v822 = vpop.f32.mrf.mxu0
        %823 = vmatprep.mubr.f32.mxu0 0.0
        %824 = vmatmul.mubr.f32.gmra.mxu0 %v685
        %v825 = vpop.f32.mrf.mxu0
        %v826 = vadd.f32 %v717, %v825
        %v827 = vpop.f32.mrf.mxu0
        %828 = vmatprep.mubr.f32.mxu0 0.0
        %829 = vmatmul.mubr.f32.gmra.mxu0 %v686
        %v830 = vpop.f32.mrf.mxu0
        %v831 = vadd.f32 %v717, %v830
        %v832 = vpop.f32.mrf.mxu0
        %833 = vmatprep.mubr.f32.mxu0 0.0
        %834 = vmatmul.mubr.f32.gmra.mxu0 %v687
        %v835 = vpop.f32.mrf.mxu0
        %v836 = vadd.f32 %v717, %v835
        %v837 = vpop.f32.mrf.mxu0
        %838 = vmatprep.mubr.f32.mxu0 0.0
        %839 = vmatmul.mubr.f32.gmra.mxu0 %v688
        %v840 = vpop.f32.mrf.mxu0
        %v841 = vadd.f32 %v717, %v840
        %v842 = vpop.f32.mrf.mxu0
        %843 = vmatprep.mubr.f32.mxu0 0.0
        %844 = vmatmul.mubr.f32.gmra.mxu0 %v689
        %v845 = vpop.f32.mrf.mxu0
        %v846 = vadd.f32 %v717, %v845
        %v847 = vpop.f32.mrf.mxu0
        %848 = vmatprep.mubr.f32.mxu0 0.0
        %849 = vmatmul.mubr.f32.gmra.mxu0 %v690
        %v850 = vpop.f32.mrf.mxu0
        %v851 = vadd.f32 %v717, %v850
        %v852 = vpop.f32.mrf.mxu0
        %853 = vmatprep.mubr.f32.mxu0 0.0
        %854 = vmatmul.mubr.f32.gmra.mxu0 %v691
        %v855 = vpop.f32.mrf.mxu0
        %v856 = vadd.f32 %v717, %v855
        %v857 = vpop.f32.mrf.mxu0
        %858 = vmatprep.mubr.f32.mxu0 0.0
        %859 = vmatmul.mubr.f32.gmra.mxu0 %v692
        %v860 = vpop.f32.mrf.mxu0
        %v861 = vadd.f32 %v717, %v860
        %v862 = vpop.f32.mrf.mxu0
        %863 = vmatprep.mubr.f32.mxu0 0.0
        %864 = vmatmul.mubr.f32.gmra.mxu0 %v693
        %v865 = vpop.f32.mrf.mxu0
        %v866 = vadd.f32 %v717, %v865
        %v867 = vpop.f32.mrf.mxu0
        %868 = vmatprep.mubr.f32.mxu0 0.0
        %869 = vmatmul.mubr.f32.gmra.mxu0 %v694
        %v870 = vpop.f32.mrf.mxu0
        %v871 = vadd.f32 %v717, %v870
        %v872 = vpop.f32.mrf.mxu0
        %873 = vmatprep.mubr.f32.mxu0 0.0
        %874 = vmatmul.mubr.f32.gmra.mxu0 %v695
        %v875 = vpop.f32.mrf.mxu0
        %v876 = vadd.f32 %v717, %v875
        %v877 = vpop.f32.mrf.mxu0
        %878 = vdwg.mxu0
        %v879 = vpack.c.bf16 %v806, %v801
        %v880 = vpack.c.bf16 %v816, %v811
        %v881 = vpack.c.bf16 %v826, %v821
        %v882 = vpack.c.bf16 %v836, %v831
        %v883 = vpack.c.bf16 %v846, %v841
        %v884 = vpack.c.bf16 %v856, %v851
        %v885 = vpack.c.bf16 %v866, %v861
        %v886 = vpack.c.bf16 %v876, %v871
        %v895 = vunpack.c.l.b16 %v879
        %v896 = vunpack.c.h.b16 %v879
        %v897 = vunpack.c.l.b16 %v880
        %v898 = vunpack.c.h.b16 %v880
        %v899 = vunpack.c.l.b16 %v881
        %v900 = vunpack.c.h.b16 %v881
        %v901 = vunpack.c.l.b16 %v882
        %v902 = vunpack.c.h.b16 %v882
        %v903 = vunpack.c.l.b16 %v883
        %v904 = vunpack.c.h.b16 %v883
        %v905 = vunpack.c.l.b16 %v884
        %v906 = vunpack.c.h.b16 %v884
        %v907 = vunpack.c.l.b16 %v885
        %v908 = vunpack.c.h.b16 %v885
        %v909 = vunpack.c.l.b16 %v886
        %v910 = vunpack.c.h.b16 %v886
        %v911 = vpack.c.b16 %v895, %v895
        %v912 = vpack.c.b16 %v896, %v896
        %v913 = vpack.c.b16 %v897, %v897
        %v914 = vpack.c.b16 %v898, %v898
        %v915 = vpack.c.b16 %v899, %v899
        %v916 = vpack.c.b16 %v900, %v900
        %v917 = vpack.c.b16 %v901, %v901
        %v918 = vpack.c.b16 %v902, %v902
        %v919 = vpack.c.b16 %v903, %v903
        %v920 = vpack.c.b16 %v904, %v904
        %v921 = vpack.c.b16 %v905, %v905
        %v922 = vpack.c.b16 %v906, %v906
        %v923 = vpack.c.b16 %v907, %v907
        %v924 = vpack.c.b16 %v908, %v908
        %v925 = vpack.c.b16 %v909, %v909
        %v926 = vpack.c.b16 %v910, %v910
        %943 = vst [vmem:[%s272] sm:$0xf] %v911
        %944 = vst [vmem:[%s272 + $0x4] sm:$0xf] %v912
        %945 = vst [vmem:[%s272 + $0x8] sm:$0xf] %v913
        %946 = vst [vmem:[%s272 + $0xc] sm:$0xf] %v914
        %947 = vst [vmem:[%s272 + $0x10] sm:$0xf] %v915
        %948 = vst [vmem:[%s272 + $0x14] sm:$0xf] %v916
        %949 = vst [vmem:[%s272 + $0x18] sm:$0xf] %v917
        %950 = vst [vmem:[%s272 + $0x1c] sm:$0xf] %v918
        %951 = vst [vmem:[%s272 + $0x20] sm:$0xf] %v919
        %952 = vst [vmem:[%s272 + $0x24] sm:$0xf] %v920
        %953 = vst [vmem:[%s272 + $0x28] sm:$0xf] %v921
        %954 = vst [vmem:[%s272 + $0x2c] sm:$0xf] %v922
        %955 = vst [vmem:[%s272 + $0x30] sm:$0xf] %v923
        %956 = vst [vmem:[%s272 + $0x34] sm:$0xf] %v924
        %957 = vst [vmem:[%s272 + $0x38] sm:$0xf] %v925
        %958 = vst [vmem:[%s272 + $0x3c] sm:$0xf] %v926
        %s959 = sand.u32 %s181, 1
        %s960 = scalar_lea.sflag [#allocation3], %s959
        %s961 = sand.u32 %s181, 1
        %s962 = smul.addr %s961, 64
        %s963 = scalar_lea.vmem [#allocation2], %s962
        // Predicated region
        $region49: #{tpu_custom_call.1} parent=47 // pred_check
          %p964 = pneg %p191
        $region50: #{tpu_custom_call.1} parent=47 // pred_check_branch
          %966 = sbr.rel (%p964) target = $region52
        $region51: #{tpu_custom_call.1} parent=47 // pred_region
          %s967 = smul.u32 16, %s21
          %s969 = ssub.s32 1024, 1024
          %970 = vsyncadd %s960, %s969
          %s971 = smul.addr %s967, 64
          %s972 = scalar_lea.hbm %s7, %s971
          %s973 = sshll.u32 %s963, 4
          %s974 = int_to_ptr.vmem [resolvable:$true] %s973
          %979 = dma.vmem_to_hbm [thread:$0]  %s974, 1024, %s972, %s960, 64, 64, 4
        $region52: #{tpu_custom_call.1} parent=47 // pred_fallthru
          _
      $region48: #{tpu_custom_call.1} parent=5 // pred_fallthru
        _
      %p980 = scmp.le.s32.totalorder 2, %s16
      // Predicated region
      $region53: #{tpu_custom_call.1} parent=5 // pred_check
        %p981 = pneg %p980
      $region54: #{tpu_custom_call.1} parent=5 // pred_check_branch
        %983 = sbr.rel (%p981) target = $region56
      $region55: #{tpu_custom_call.1} parent=5 // pred_region
        %s984 = ssub.s32 %s16, 2
        // Predicated region
        $region57: #{tpu_custom_call.1} parent=55 // pred_check
          %p985 = pneg %p197
        $region58: #{tpu_custom_call.1} parent=55 // pred_check_branch
          %987 = sbr.rel (%p985) target = $region60
        $region59: #{tpu_custom_call.1} parent=55 // pred_region
          %s988 = sand.u32 %s182, 1
          %s989 = scalar_lea.sflag [#allocation3], %s988
          %s990 = sand.u32 %s182, 1
          %s991 = smul.addr %s990, 64
          %s992 = scalar_lea.vmem [#allocation2], %s991
          %993 = dma.done %s989, 1024
        $region60: #{tpu_custom_call.1} parent=55 // pred_fallthru
          _
      $region56: #{tpu_custom_call.1} parent=5 // pred_fallthru
        _
    $region6: #{tpu_custom_call.1} parent=1 // loop_footer
      %s20 = sadd.s32 1, %s16
    $region7: #{tpu_custom_call.1} parent=1 // loop_footer_branch
      %15 = sbr.rel target = $region3
    $region8: #{tpu_custom_call.1} parent=1 // loop_exit
      _
    %994 = vsyncpa [#allocation3], 1
    %s995 = scalar_lea.sflag [#allocation3], 1
    %996 = vsyncpa %s995, 1

</llo_original>
